<compile_context>
chip_gen: v5e
topology: v5e:2x2
jax: 0.10.0
libtpu: 0.0.40
codegen_flags: <defaults>
</compile_context>

<pallas_src>
import jax
import jax.numpy as jnp
from jax.experimental import pallas as pl
from jax.experimental.pallas import tpu as pltpu

IN_FEATURES = 1472
HIDDEN = 100
N_CLASSES = 21

_NEG_INF = -1e30  # finite "-inf" for padded class lanes: exp()->0, never wins max


def _round_up(n, m):
    return ((n + m - 1) // m) * m


def fc_classifier_kernel(x_ref, w0_ref, b0_ref, w1_ref, b1_ref, o_ref):
    # layer0: bf16 x-tile @ bf16 W0 on the MXU with f32 accumulation, +bias, ReLU.
    h = jnp.dot(x_ref[...], w0_ref[...], preferred_element_type=jnp.float32)
    h = jnp.maximum(h + b0_ref[...], 0.0)

    # layer1 (tiny, f32): h @ W1 + b1.  Padded class lanes carry a -1e30 bias.
    logits = jnp.dot(h, w1_ref[...], preferred_element_type=jnp.float32) + b1_ref[...]

    # Numerically stable log_softmax over the lane-dense (128-wide) class axis.
    # Padded lanes are ~-1e30: never the max, exp underflows to exactly 0.
    m = jnp.max(logits, axis=-1, keepdims=True)
    shifted = logits - m
    lse = jnp.log(jnp.sum(jnp.exp(shifted), axis=-1, keepdims=True))
    o_ref[...] = (shifted - lse).astype(o_ref.dtype)


def fc_classifier(x, w0, b0, w1, b1, *, block_m=2048):
    """x: [N, 1472]; w0: [1472, H]; b0: [1, H]; w1: [H, C]; b1: [1, C]."""
    # mirrors x.type(torch.FloatTensor), then stream as bf16 (f32 accumulation
    # happens on the MXU) to halve the dominant HBM read.
    x = x.astype(jnp.float32).astype(jnp.bfloat16)
    N, D = x.shape
    H = w0.shape[1]
    C = w1.shape[1]

    # --- Pad hidden dim to a lane-dense multiple of 128 (zero padding is
    #     mathematically inert: relu(0 + 0) = 0, zero rows of W1 add 0). ---
    H_pad = _round_up(H, 128)
    if H_pad != H:
        w0 = jnp.pad(w0, ((0, 0), (0, H_pad - H)))
        b0 = jnp.pad(b0, ((0, 0), (0, H_pad - H)))
        w1 = jnp.pad(w1, ((0, H_pad - H), (0, 0)))

    # --- Pad class dim to 128 for full-width output stores.  Zero weight
    #     columns + -1e30 bias mask the padded logits out of the softmax. ---
    C_pad = _round_up(C, 128)
    if C_pad != C:
        w1 = jnp.pad(w1, ((0, 0), (0, C_pad - C)))
        b1 = jnp.pad(b1, ((0, 0), (0, C_pad - C)), constant_values=_NEG_INF)

    w0 = w0.astype(jnp.bfloat16)   # bf16 MXU operand (also fixes v5e f32-matmul cost)
    b0 = b0.astype(jnp.float32)
    w1 = w1.astype(jnp.float32)    # tiny second matmul stays f32
    b1 = b1.astype(jnp.float32)

    # --- Batch tiling: bf16 sublane packing wants multiples of 16; cap block_m
    #     at ~ceil(N/2) so the "parallel" axis always has >= 2 tiles (keeps both
    #     v7x TensorCores busy).  Padded zero rows are sliced off the output. ---
    block_m = min(block_m, _round_up(pl.cdiv(N, 2), 16))
    block_m = max(16, _round_up(block_m, 16))
    N_pad = _round_up(N, block_m)
    if N_pad != N:
        x = jnp.pad(x, ((0, N_pad - N), (0, 0)))
    grid_m = N_pad // block_m

    cost = pl.CostEstimate(
        flops=2 * N_pad * D * H_pad + 2 * N_pad * H_pad * C_pad,
        transcendentals=N_pad * C_pad,
        bytes_accessed=(N_pad * D * 2            # bf16 x stream
                        + D * H_pad * 2          # bf16 W0
                        + H_pad * C_pad * 4      # f32 W1
                        + (H_pad + C_pad) * 4    # biases
                        + N_pad * C_pad * 4),    # f32 output
    )

    out = pl.pallas_call(
        fc_classifier_kernel,
        out_shape=jax.ShapeDtypeStruct((N_pad, C_pad), jnp.float32),
        grid=(grid_m,),
        in_specs=[
            pl.BlockSpec((block_m, D), lambda i: (i, 0)),      # x batch tile (bf16 stream)
            pl.BlockSpec((D, H_pad), lambda i: (0, 0)),        # W0 (resident, constant block)
            pl.BlockSpec((1, H_pad), lambda i: (0, 0)),        # b0
            pl.BlockSpec((H_pad, C_pad), lambda i: (0, 0)),    # W1
            pl.BlockSpec((1, C_pad), lambda i: (0, 0)),        # b1
        ],
        out_specs=pl.BlockSpec((block_m, C_pad), lambda i: (i, 0)),
        compiler_params=pltpu.CompilerParams(
            dimension_semantics=("parallel",)),                # shards batch tiles over TCs
        cost_estimate=cost,
    )(x, w0, b0, w1, b1)

    return out[:N, :C]


def reference_f32(x, w0, b0, w1, b1):
    h = jnp.maximum(x.astype(jnp.float32) @ w0 + b0, 0.0)
    return jax.nn.log_softmax(h @ w1 + b1, axis=-1)


def reference_bf16_stream(x, w0, b0, w1, b1):
    # Same math as the kernel: bf16 x/W0 operands, f32 accumulation.
    h = jnp.dot(x.astype(jnp.float32).astype(jnp.bfloat16),
                w0.astype(jnp.bfloat16),
                preferred_element_type=jnp.float32)
    h = jnp.maximum(h + b0, 0.0)
    logits = jnp.dot(h, w1, preferred_element_type=jnp.float32) + b1
    return jax.nn.log_softmax(logits, axis=-1)


if __name__ == "__main__":
    key = jax.random.PRNGKey(0)
    k_x, k_w0, k_b0, k_w1, k_b1 = jax.random.split(key, 5)

    # Small batch of per-pixel zoomout feature vectors; deliberately NOT a
    # multiple of the tile size to exercise the padding / tail-handling path.
    N = 50
    x = jax.random.normal(k_x, (N, IN_FEATURES), dtype=jnp.float32)

    # Deterministic parameter init (Kaiming-uniform-ish scale, like nn.Linear)
    lim0 = 1.0 / jnp.sqrt(IN_FEATURES)
    w0 = jax.random.uniform(k_w0, (IN_FEATURES, HIDDEN), jnp.float32, -lim0, lim0)
    b0 = jax.random.uniform(k_b0, (1, HIDDEN), jnp.float32, -lim0, lim0)
    lim1 = 1.0 / jnp.sqrt(HIDDEN)
    w1 = jax.random.uniform(k_w1, (HIDDEN, N_CLASSES), jnp.float32, -lim1, lim1)
    b1 = jax.random.uniform(k_b1, (1, N_CLASSES), jnp.float32, -lim1, lim1)

    out = fc_classifier(x, w0, b0, w1, b1)
    out = jax.block_until_ready(out)

    assert out.shape == (N, N_CLASSES)
    assert bool(jnp.all(jnp.isfinite(out)))

    # Tight check vs. a reference that uses the same bf16 operands / f32 acc.
    ref_bf16 = reference_bf16_stream(x, w0, b0, w1, b1)
    assert jnp.allclose(out, ref_bf16, atol=1e-3, rtol=1e-3), "mismatch vs bf16-stream reference"

    # Loose check vs. the pure-f32 PyTorch-equivalent reference (bf16 x/W0
    # stream costs ~1e-2 relative accuracy, as accepted in the perf review).
    ref_f32 = reference_f32(x, w0, b0, w1, b1)
    assert jnp.allclose(out, ref_f32, atol=5e-2, rtol=5e-2), "mismatch vs f32 reference"

    print("KERNEL_OK")
</pallas_src>

<mosaic_0001>
module attributes {stable_mosaic.version = 11 : i64} {
  func.func @fc_classifier_kernel(%arg0: i32, %arg1: memref<32x1472xbf16, #tpu.memory_space<vmem>>, %arg2: memref<1472x128xbf16, #tpu.memory_space<vmem>>, %arg3: memref<1x128xf32, #tpu.memory_space<vmem>>, %arg4: memref<128x128xf32, #tpu.memory_space<vmem>>, %arg5: memref<1x128xf32, #tpu.memory_space<vmem>>, %arg6: memref<32x128xf32, #tpu.memory_space<vmem>>) attributes {dimension_semantics = [#tpu.dimension_semantics<parallel>], iteration_bounds = array<i64: 2>, scalar_prefetch = 0 : i64, scratch_operands = 0 : i64, tpu.core_type = #tpu.core_type<tc>, window_params = [{transform_indices = @transform_0, window_bounds = array<i64: 32, 1472>}, {pipeline_mode = #tpu.pipeline_mode<synchronous>, transform_indices = @transform_1, window_bounds = array<i64: 1472, 128>}, {pipeline_mode = #tpu.pipeline_mode<synchronous>, transform_indices = @transform_2, window_bounds = array<i64: 1, 128>}, {pipeline_mode = #tpu.pipeline_mode<synchronous>, transform_indices = @transform_3, window_bounds = array<i64: 128, 128>}, {pipeline_mode = #tpu.pipeline_mode<synchronous>, transform_indices = @transform_4, window_bounds = array<i64: 1, 128>}, {transform_indices = @transform_5, window_bounds = array<i64: 32, 128>}]} {
    %c0 = arith.constant 0 : index
    %c0_0 = arith.constant 0 : index
    %0 = vector.load %arg1[%c0, %c0_0] : memref<32x1472xbf16, #tpu.memory_space<vmem>>, vector<32x1472xbf16>
    %c0_1 = arith.constant 0 : index
    %c0_2 = arith.constant 0 : index
    %1 = vector.load %arg2[%c0_1, %c0_2] : memref<1472x128xbf16, #tpu.memory_space<vmem>>, vector<1472x128xbf16>
    %cst = arith.constant dense<0.000000e+00> : vector<32x128xf32>
    %2 = tpu.matmul %0, %1, %cst {dimension_numbers = #tpu.dot_dimension_numbers<[1], [0], [0], [1], [0, 0, 1, 1], [], []>} : vector<32x1472xbf16>, vector<1472x128xbf16>, vector<32x128xf32> -> vector<32x128xf32>
    %c0_3 = arith.constant 0 : index
    %c0_4 = arith.constant 0 : index
    %3 = vector.load %arg3[%c0_3, %c0_4] : memref<1x128xf32, #tpu.memory_space<vmem>>, vector<1x128xf32>
    %4 = vector.broadcast %3 : vector<1x128xf32> to vector<32x128xf32>
    %5 = arith.addf %2, %4 : vector<32x128xf32>
    %cst_5 = arith.constant 0.000000e+00 : f32
    %6 = vector.broadcast %cst_5 : f32 to vector<32x128xf32>
    %7 = arith.maximumf %5, %6 : vector<32x128xf32>
    %c0_6 = arith.constant 0 : index
    %c0_7 = arith.constant 0 : index
    %8 = vector.load %arg4[%c0_6, %c0_7] : memref<128x128xf32, #tpu.memory_space<vmem>>, vector<128x128xf32>
    %cst_8 = arith.constant dense<0.000000e+00> : vector<32x128xf32>
    %9 = tpu.matmul %7, %8, %cst_8 {dimension_numbers = #tpu.dot_dimension_numbers<[1], [0], [0], [1], [0, 0, 1, 1], [], []>} : vector<32x128xf32>, vector<128x128xf32>, vector<32x128xf32> -> vector<32x128xf32>
    %c0_9 = arith.constant 0 : index
    %c0_10 = arith.constant 0 : index
    %10 = vector.load %arg5[%c0_9, %c0_10] : memref<1x128xf32, #tpu.memory_space<vmem>>, vector<1x128xf32>
    %11 = vector.broadcast %10 : vector<1x128xf32> to vector<32x128xf32>
    %12 = arith.addf %9, %11 : vector<32x128xf32>
    %cst_11 = arith.constant dense<0xFF800000> : vector<32xf32>
    %13 = vector.multi_reduction <maximumf>, %12, %cst_11 [1] : vector<32x128xf32> to vector<32xf32>
    %14 = vector.shape_cast %13 : vector<32xf32> to vector<32x1xf32>
    %15 = vector.broadcast %14 : vector<32x1xf32> to vector<32x128xf32>
    %16 = arith.subf %12, %15 : vector<32x128xf32>
    %17 = math.exp %16 : vector<32x128xf32>
    %cst_12 = arith.constant dense<0.000000e+00> : vector<32xf32>
    %18 = vector.multi_reduction <add>, %17, %cst_12 [1] : vector<32x128xf32> to vector<32xf32>
    %19 = vector.shape_cast %18 : vector<32xf32> to vector<32x1xf32>
    %20 = math.log %19 : vector<32x1xf32>
    %21 = vector.broadcast %20 : vector<32x1xf32> to vector<32x128xf32>
    %22 = arith.subf %16, %21 : vector<32x128xf32>
    %c0_13 = arith.constant 0 : index
    %c0_14 = arith.constant 0 : index
    %23 = vector.load %arg6[%c0_13, %c0_14] : memref<32x128xf32, #tpu.memory_space<vmem>>, vector<32x128xf32>
    tpu.vector_store %arg6[%c0_13, %c0_14], %22 {strides = array<i32>} : memref<32x128xf32, #tpu.memory_space<vmem>>, vector<32x128xf32>,
    return
  }
  func.func @transform_0(%arg0: i32) -> (i32, i32) {
    %c0_i32 = arith.constant 0 : i32
    %c0_i32_0 = arith.constant 0 : i32
    return %arg0, %c0_i32 : i32, i32
  }
  func.func @transform_1(%arg0: i32) -> (i32, i32) {
    %c0_i32 = arith.constant 0 : i32
    %c0_i32_0 = arith.constant 0 : i32
    %c0_i32_1 = arith.constant 0 : i32
    return %c0_i32, %c0_i32_0 : i32, i32
  }
  func.func @transform_2(%arg0: i32) -> (i32, i32) {
    %c0_i32 = arith.constant 0 : i32
    %c0_i32_0 = arith.constant 0 : i32
    %c0_i32_1 = arith.constant 0 : i32
    return %c0_i32, %c0_i32_0 : i32, i32
  }
  func.func @transform_3(%arg0: i32) -> (i32, i32) {
    %c0_i32 = arith.constant 0 : i32
    %c0_i32_0 = arith.constant 0 : i32
    %c0_i32_1 = arith.constant 0 : i32
    return %c0_i32, %c0_i32_0 : i32, i32
  }
  func.func @transform_4(%arg0: i32) -> (i32, i32) {
    %c0_i32 = arith.constant 0 : i32
    %c0_i32_0 = arith.constant 0 : i32
    %c0_i32_1 = arith.constant 0 : i32
    return %c0_i32, %c0_i32_0 : i32, i32
  }
  func.func @transform_5(%arg0: i32) -> (i32, i32) {
    %c0_i32 = arith.constant 0 : i32
    %c0_i32_0 = arith.constant 0 : i32
    return %arg0, %c0_i32 : i32, i32
  }
}

</mosaic_0001>

<llo_original>
// kernel: tpu_custom_call.1
$region0: #{tpu_custom_call.1}
  #allocation0 [shape = 'u32[]', space=smem, size = 0x4, offset = 0x4, fixed_abs, tag = 'smem constant byte address 0x4 - core index']
  #allocation1 [shape = 'u32[72,128]{1,0:T(1,128)}', space=vmem, size = 0x9000, scoped, tag = 'internal scratch']
  %s0 = inlined_call_operand.hbm [shape: bf16[64,1472], index: 0, kind: input, shape index: {}]
  %s1 = inlined_call_operand.hbm [shape: bf16[1472,128], index: 1, kind: input, shape index: {}]
  %s2 = inlined_call_operand.vmem [shape: f32[1,128], index: 2, kind: input, shape index: {}]
  %s3 = inlined_call_operand.hbm [shape: f32[128,128], index: 3, kind: input, shape index: {}]
  %s4 = inlined_call_operand.vmem [shape: f32[1,128], index: 4, kind: input, shape index: {}]
  %s5 = inlined_call_operand.hbm [shape: f32[64,128], index: 5, kind: output, shape index: {}]
  %s6 = sld [smem:[#allocation0]]
  $region65: #{tpu_custom_call.1} parent=0
    _
  %s8 = ssub.s32 1, %s6
  %s9 = scalar_select 0, %s8, %s6
  $region1: #{tpu_custom_call.1} parent=0
    #allocation2 [shape = 'u8[196608]{0}', space=vmem, size = 0x30000, scoped, tag = 'input window, operand 0']
    #allocation3 [shape = 's32[2]{0}', space=sflag, size = 0x8, scoped, tag = 'scoped memory for tpu_custom_call.1']
    #allocation4 [shape = 's32[2]{0}', space=sflag, size = 0x8, scoped, tag = 'scoped memory for tpu_custom_call.1']
    #allocation5 [shape = 'u8[376832]{0}', space=vmem, size = 0x5c000, scoped, tag = 'input window, operand 1, single buffered']
    #allocation6 [shape = 's32[1]{0}', space=sflag, size = 0x4, scoped, tag = 'scoped memory for tpu_custom_call.1']
    #allocation7 [shape = 'u8[65536]{0}', space=vmem, size = 0x10000, scoped, tag = 'input window, operand 3, single buffered']
    #allocation8 [shape = 'u8[32768]{0}', space=vmem, size = 0x8000, scoped, tag = 'output window, operand 0']
    %10 = vsyncpa [#allocation3], 0
    %s11 = scalar_lea.sflag [#allocation3], 1
    %12 = vsyncpa %s11, 0
    %13 = vsyncpa [#allocation6], 0
    %14 = vsyncpa [#allocation4], 0
    %s15 = scalar_lea.sflag [#allocation4], 1
    %16 = vsyncpa %s15, 0
    loop: start=0, step=1, limit=4
    $region2: #{tpu_custom_call.1} parent=1 // loop_pre_header
      _
    $region3: #{tpu_custom_call.1} parent=1 // loop_header
      %s18 = sphi 0, %s22
      %p19 = scmp.ge.s32.totalorder %s18, 4
      %s28 = sphi 0, %s30
      %s31 = sphi 0, %s28
      %s32 = sphi 0, %s31
      %s48 = sphi 0, %s32
      %s52 = sphi 0, %s52
      %s54 = sphi 0, %s52
      %s55 = sphi 0, %s54
      %s69 = sphi 0, %s55
      %s73 = sphi 0, %s73
      %s75 = sphi 0, %s73
      %s76 = sphi 0, %s75
      %s90 = sphi 0, %s76
      %s94 = sphi 0, %s94
      %s96 = sphi 0, %s94
      %s97 = sphi 0, %s96
      %s111 = sphi 0, %s97
      %s115 = sphi 0, %s115
      %s117 = sphi 0, %s115
      %s118 = sphi 0, %s117
      %s132 = sphi 0, %s118
      %s138 = sphi 0, %s140
      %s141 = sphi 0, %s138
      %s142 = sphi 0, %s141
      %s158 = sphi 0, %s142
    $region4: #{tpu_custom_call.1} parent=1 // loop_header_branch
      %21 = sbr.rel (%p19) target = $region8
    $region5: #{tpu_custom_call.1} parent=1 // loop_body
      %s23 = ssub.s32 %s18, 1
      %s24 = ssub.s32 %s18, 2
      %s25 = sadd.s32 %s18, 1
      %s26 = ssub.s32 %s18, %s25
      %p27 = scmp.eq.s32.totalorder %s26, 0
      %s29 = sadd.s32 %s28, 1
      %s30 = scalar_select %p27, %s28, %s29
      %p33 = pneg %p27
      %p34 = scmp.eq.s32.totalorder %s18, 1
      %p35 = por %p33, %p34
      %p36 = scmp.ne.s32.totalorder %s28, %s31
      %p37 = scmp.eq.s32.totalorder %s18, 0
      %p38 = por %p36, %p37
      %p39 = scmp.ne.s32.totalorder %s28, %s31
      %p40 = scmp.eq.s32.totalorder %s23, 1
      %p41 = por %p39, %p40
      %p42 = scmp.ne.s32.totalorder %s31, %s32
      %p43 = scmp.eq.s32.totalorder %s23, 0
      %p44 = por %p42, %p43
      %p45 = scmp.ne.s32.totalorder %s31, %s32
      %p46 = scmp.eq.s32.totalorder %s24, 1
      %p47 = por %p45, %p46
      %p49 = scmp.ne.s32.totalorder %s32, %s48
      %p50 = scmp.eq.s32.totalorder %s24, 0
      %p51 = por %p49, %p50
      %s53 = sadd.s32 %s52, 1
      %p56 = scmp.eq.s32.totalorder %s18, 1
      %p57 = scmp.ne.s32.totalorder %s52, %s54
      %p58 = scmp.eq.s32.totalorder %s18, 0
      %p59 = por %p57, %p58
      %p60 = scmp.ne.s32.totalorder %s52, %s54
      %p61 = scmp.eq.s32.totalorder %s23, 1
      %p62 = por %p60, %p61
      %p63 = scmp.ne.s32.totalorder %s54, %s55
      %p64 = scmp.eq.s32.totalorder %s23, 0
      %p65 = por %p63, %p64
      %p66 = scmp.ne.s32.totalorder %s54, %s55
      %p67 = scmp.eq.s32.totalorder %s24, 1
      %p68 = por %p66, %p67
      %p70 = scmp.ne.s32.totalorder %s55, %s69
      %p71 = scmp.eq.s32.totalorder %s24, 0
      %p72 = por %p70, %p71
      %s74 = sadd.s32 %s73, 1
      %p77 = scmp.eq.s32.totalorder %s18, 1
      %p78 = scmp.ne.s32.totalorder %s73, %s75
      %p79 = scmp.eq.s32.totalorder %s18, 0
      %p80 = por %p78, %p79
      %p81 = scmp.ne.s32.totalorder %s73, %s75
      %p82 = scmp.eq.s32.totalorder %s23, 1
      %p83 = por %p81, %p82
      %p84 = scmp.ne.s32.totalorder %s75, %s76
      %p85 = scmp.eq.s32.totalorder %s23, 0
      %p86 = por %p84, %p85
      %p87 = scmp.ne.s32.totalorder %s75, %s76
      %p88 = scmp.eq.s32.totalorder %s24, 1
      %p89 = por %p87, %p88
      %p91 = scmp.ne.s32.totalorder %s76, %s90
      %p92 = scmp.eq.s32.totalorder %s24, 0
      %p93 = por %p91, %p92
      %s95 = sadd.s32 %s94, 1
      %p98 = scmp.eq.s32.totalorder %s18, 1
      %p99 = scmp.ne.s32.totalorder %s94, %s96
      %p100 = scmp.eq.s32.totalorder %s18, 0
      %p101 = por %p99, %p100
      %p102 = scmp.ne.s32.totalorder %s94, %s96
      %p103 = scmp.eq.s32.totalorder %s23, 1
      %p104 = por %p102, %p103
      %p105 = scmp.ne.s32.totalorder %s96, %s97
      %p106 = scmp.eq.s32.totalorder %s23, 0
      %p107 = por %p105, %p106
      %p108 = scmp.ne.s32.totalorder %s96, %s97
      %p109 = scmp.eq.s32.totalorder %s24, 1
      %p110 = por %p108, %p109
      %p112 = scmp.ne.s32.totalorder %s97, %s111
      %p113 = scmp.eq.s32.totalorder %s24, 0
      %p114 = por %p112, %p113
      %s116 = sadd.s32 %s115, 1
      %p119 = scmp.eq.s32.totalorder %s18, 1
      %p120 = scmp.ne.s32.totalorder %s115, %s117
      %p121 = scmp.eq.s32.totalorder %s18, 0
      %p122 = por %p120, %p121
      %p123 = scmp.ne.s32.totalorder %s115, %s117
      %p124 = scmp.eq.s32.totalorder %s23, 1
      %p125 = por %p123, %p124
      %p126 = scmp.ne.s32.totalorder %s117, %s118
      %p127 = scmp.eq.s32.totalorder %s23, 0
      %p128 = por %p126, %p127
      %p129 = scmp.ne.s32.totalorder %s117, %s118
      %p130 = scmp.eq.s32.totalorder %s24, 1
      %p131 = por %p129, %p130
      %p133 = scmp.ne.s32.totalorder %s118, %s132
      %p134 = scmp.eq.s32.totalorder %s24, 0
      %p135 = por %p133, %p134
      %s136 = ssub.s32 %s18, %s25
      %p137 = scmp.eq.s32.totalorder %s136, 0
      %s139 = sadd.s32 %s138, 1
      %s140 = scalar_select %p137, %s138, %s139
      %p143 = pneg %p137
      %p144 = scmp.eq.s32.totalorder %s18, 1
      %p145 = por %p143, %p144
      %p146 = scmp.ne.s32.totalorder %s138, %s141
      %p147 = scmp.eq.s32.totalorder %s18, 0
      %p148 = por %p146, %p147
      %p149 = scmp.ne.s32.totalorder %s138, %s141
      %p150 = scmp.eq.s32.totalorder %s23, 1
      %p151 = por %p149, %p150
      %p152 = scmp.ne.s32.totalorder %s141, %s142
      %p153 = scmp.eq.s32.totalorder %s23, 0
      %p154 = por %p152, %p153
      %p155 = scmp.ne.s32.totalorder %s141, %s142
      %p156 = scmp.eq.s32.totalorder %s24, 1
      %p157 = por %p155, %p156
      %p159 = scmp.ne.s32.totalorder %s142, %s158
      %p160 = scmp.eq.s32.totalorder %s24, 0
      %p161 = por %p159, %p160
      %p162 = scmp.le.s32.totalorder 1, %s18
      %p163 = scmp.lt.s32.totalorder %s18, 3
      %p164 = pnand %p162, %p163
      %p165 = pneg %p164
      // Predicated region
      $region9: #{tpu_custom_call.1} parent=5 // pred_check
        _
      $region10: #{tpu_custom_call.1} parent=5 // pred_check_branch
        %167 = sbr.rel (%p164) target = $region12
      $region11: #{tpu_custom_call.1} parent=5 // pred_region
        %s168 = ssub.s32 %s18, 1
        // Predicated region
        $region13: #{tpu_custom_call.1} parent=11 // pred_check
          %p169 = pneg %p65
        $region14: #{tpu_custom_call.1} parent=11 // pred_check_branch
          %171 = sbr.rel (%p169) target = $region16
        $region15: #{tpu_custom_call.1} parent=11 // pred_region
          %173 = vsyncadd [#allocation6], 0
          %s174 = sshll.u32 %s1, 4
          %s175 = int_to_ptr.hbm [resolvable:$true] %s174
          %s176 = sshll.u32 [#allocation5], 4
          %s177 = int_to_ptr.vmem [resolvable:$true] %s176
          %182 = dma.hbm_to_vmem [thread:$0]  %s175, 11776, %s177, [#allocation6], 64, 64, 4
        $region16: #{tpu_custom_call.1} parent=11 // pred_fallthru
          _
        // Predicated region
        $region17: #{tpu_custom_call.1} parent=11 // pred_check
          %p183 = pneg %p86
        $region18: #{tpu_custom_call.1} parent=11 // pred_check_branch
          %185 = sbr.rel (%p183) target = $region20
        $region19: #{tpu_custom_call.1} parent=11 // pred_region
          _
        $region20: #{tpu_custom_call.1} parent=11 // pred_fallthru
          _
        // Predicated region
        $region21: #{tpu_custom_call.1} parent=11 // pred_check
          %p186 = pneg %p107
        $region22: #{tpu_custom_call.1} parent=11 // pred_check_branch
          %188 = sbr.rel (%p186) target = $region24
        $region23: #{tpu_custom_call.1} parent=11 // pred_region
          %190 = vsyncadd [#allocation6], 0
          %s191 = sshll.u32 %s3, 4
          %s192 = int_to_ptr.hbm [resolvable:$true] %s191
          %s193 = sshll.u32 [#allocation7], 4
          %s194 = int_to_ptr.vmem [resolvable:$true] %s193
          %199 = dma.hbm_to_vmem [thread:$0]  %s192, 2048, %s194, [#allocation6], 128, 128, 8
        $region24: #{tpu_custom_call.1} parent=11 // pred_fallthru
          _
        // Predicated region
        $region25: #{tpu_custom_call.1} parent=11 // pred_check
          %p200 = pneg %p128
        $region26: #{tpu_custom_call.1} parent=11 // pred_check_branch
          %202 = sbr.rel (%p200) target = $region28
        $region27: #{tpu_custom_call.1} parent=11 // pred_region
          _
        $region28: #{tpu_custom_call.1} parent=11 // pred_fallthru
          _
      $region12: #{tpu_custom_call.1} parent=5 // pred_fallthru
        _
      %p203 = scmp.lt.s32.totalorder %s18, 2
      // Predicated region
      $region29: #{tpu_custom_call.1} parent=5 // pred_check
        %p204 = pneg %p203
      $region30: #{tpu_custom_call.1} parent=5 // pred_check_branch
        %206 = sbr.rel (%p204) target = $region32
      $region31: #{tpu_custom_call.1} parent=5 // pred_region
        // Predicated region
        $region33: #{tpu_custom_call.1} parent=31 // pred_check
          %p207 = pneg %p38
        $region34: #{tpu_custom_call.1} parent=31 // pred_check_branch
          %209 = sbr.rel (%p207) target = $region36
        $region35: #{tpu_custom_call.1} parent=31 // pred_region
          %s210 = sand.u32 %s28, 1
          %s211 = scalar_lea.sflag [#allocation3], %s210
          %s212 = sand.u32 %s28, 1
          %s213 = smul.addr %s212, 192
          %s214 = scalar_lea.vmem [#allocation2], %s213
          %s215 = smul.u32 4, %s18
          %217 = vsyncadd %s211, 0
          %s218 = smul.addr %s215, 12
          %s219 = smul.addr %s218, 4
          %s220 = scalar_lea.hbm %s0, %s219
          %s221 = sshll.u32 %s220, 4
          %s222 = int_to_ptr.hbm [resolvable:$true] %s221
          %s223 = sshll.u32 %s214, 4
          %s224 = int_to_ptr.vmem [resolvable:$true] %s223
          %229 = dma.hbm_to_vmem [thread:$0]  %s222, 3072, %s224, %s211, 768, 768, 48
        $region36: #{tpu_custom_call.1} parent=31 // pred_fallthru
          _
      $region32: #{tpu_custom_call.1} parent=5 // pred_fallthru
        _
      %p230 = scmp.le.s32.totalorder 1, %s18
      %p231 = scmp.lt.s32.totalorder %s18, 3
      %p232 = pnand %p230, %p231
      %p233 = pneg %p232
      // Predicated region
      $region37: #{tpu_custom_call.1} parent=5 // pred_check
        _
      $region38: #{tpu_custom_call.1} parent=5 // pred_check_branch
        %235 = sbr.rel (%p232) target = $region40
      $region39: #{tpu_custom_call.1} parent=5 // pred_region
        %s236 = ssub.s32 %s18, 1
        %s237 = sand.u32 %s31, 1
        %s238 = scalar_lea.sflag [#allocation3], %s237
        %s239 = sand.u32 %s31, 1
        %s240 = smul.addr %s239, 192
        %s241 = scalar_lea.vmem [#allocation2], %s240
        // Predicated region
        $region41: #{tpu_custom_call.1} parent=39 // pred_check
          %p242 = pneg %p44
        $region42: #{tpu_custom_call.1} parent=39 // pred_check_branch
          %244 = sbr.rel (%p242) target = $region44
        $region43: #{tpu_custom_call.1} parent=39 // pred_region
          %246 = dma.done %s238, 3072
        $region44: #{tpu_custom_call.1} parent=39 // pred_fallthru
          _
        // Predicated region
        $region45: #{tpu_custom_call.1} parent=39 // pred_check
          %p247 = pneg %p65
        $region46: #{tpu_custom_call.1} parent=39 // pred_check_branch
          %249 = sbr.rel (%p247) target = $region48
        $region47: #{tpu_custom_call.1} parent=39 // pred_region
          %251 = dma.done [#allocation6], 11776
        $region48: #{tpu_custom_call.1} parent=39 // pred_fallthru
          _
        // Predicated region
        $region49: #{tpu_custom_call.1} parent=39 // pred_check
          %p252 = pneg %p107
        $region50: #{tpu_custom_call.1} parent=39 // pred_check_branch
          %254 = sbr.rel (%p252) target = $region52
        $region51: #{tpu_custom_call.1} parent=39 // pred_region
          %256 = dma.done [#allocation6], 2048
        $region52: #{tpu_custom_call.1} parent=39 // pred_fallthru
          _
        %s257 = sand.u32 %s31, 1
        %s258 = scalar_lea.sflag [#allocation3], %s257
        %s259 = sand.u32 %s31, 1
        %s260 = smul.addr %s259, 192
        %s261 = scalar_lea.vmem [#allocation2], %s260
        %p262 = pneg %p44
        %p263 = pneg %p41
        %p264 = pneg %p65
        %p265 = pneg %p62
        %p266 = pneg %p86
        %p267 = pneg %p83
        %p268 = pneg %p107
        %p269 = pneg %p104
        %p270 = pneg %p128
        %p271 = pneg %p125
        %p272 = pneg %p154
        %p273 = pneg %p151
        %s274 = sand.u32 %s141, 1
        %s275 = scalar_lea.sflag [#allocation4], %s274
        %s276 = sand.u32 %s141, 1
        %s277 = smul.addr %s276, 32
        %s278 = scalar_lea.vmem [#allocation8], %s277
        %s279 = smul.u32 4, %s23
        %s280 = smul.u32 4, %s23
        %v282 = vld [vmem:[%s241] sm:$0xff]
        %v283 = vld [vmem:[%s241 + $0x8] sm:$0xff]
        %v284 = vld [vmem:[%s241 + $0x10] sm:$0xff]
        %v285 = vld [vmem:[%s241 + $0x18] sm:$0xff]
        %v286 = vld [vmem:[%s241 + $0x20] sm:$0xff]
        %v287 = vld [vmem:[%s241 + $0x28] sm:$0xff]
        %v288 = vld [vmem:[%s241 + $0x30] sm:$0xff]
        %v289 = vld [vmem:[%s241 + $0x38] sm:$0xff]
        %v290 = vld [vmem:[%s241 + $0x40] sm:$0xff]
        %v291 = vld [vmem:[%s241 + $0x48] sm:$0xff]
        %v292 = vld [vmem:[%s241 + $0x50] sm:$0xff]
        %v293 = vld [vmem:[%s241 + $0x58] sm:$0xff]
        %v294 = vld [vmem:[%s241 + $0x60] sm:$0xff]
        %v295 = vld [vmem:[%s241 + $0x68] sm:$0xff]
        %v296 = vld [vmem:[%s241 + $0x70] sm:$0xff]
        %v297 = vld [vmem:[%s241 + $0x78] sm:$0xff]
        %v298 = vld [vmem:[%s241 + $0x80] sm:$0xff]
        %v299 = vld [vmem:[%s241 + $0x88] sm:$0xff]
        %v300 = vld [vmem:[%s241 + $0x90] sm:$0xff]
        %v301 = vld [vmem:[%s241 + $0x98] sm:$0xff]
        %v302 = vld [vmem:[%s241 + $0xa0] sm:$0xff]
        %v303 = vld [vmem:[%s241 + $0xa8] sm:$0xff]
        %v304 = vld [vmem:[%s241 + $0xb0] sm:$0xff]
        %v305 = vld [vmem:[%s241 + $0xb8] sm:$0xff]
        %v306 = vld [vmem:[#allocation5] sm:$0xf]
        %v307 = vld [vmem:[#allocation5 + $0x4] sm:$0xf]
        %v308 = vld [vmem:[#allocation5 + $0x8] sm:$0xf]
        %v309 = vld [vmem:[#allocation5 + $0xc] sm:$0xf]
        %v310 = vld [vmem:[#allocation5 + $0x10] sm:$0xf]
        %v311 = vld [vmem:[#allocation5 + $0x14] sm:$0xf]
        %v312 = vld [vmem:[#allocation5 + $0x18] sm:$0xf]
        %v313 = vld [vmem:[#allocation5 + $0x1c] sm:$0xf]
        %v314 = vld [vmem:[#allocation5 + $0x20] sm:$0xf]
        %v315 = vld [vmem:[#allocation5 + $0x24] sm:$0xf]
        %v316 = vld [vmem:[#allocation5 + $0x28] sm:$0xf]
        %v317 = vld [vmem:[#allocation5 + $0x2c] sm:$0xf]
        %v318 = vld [vmem:[#allocation5 + $0x30] sm:$0xf]
        %v319 = vld [vmem:[#allocation5 + $0x34] sm:$0xf]
        %v320 = vld [vmem:[#allocation5 + $0x38] sm:$0xf]
        %v321 = vld [vmem:[#allocation5 + $0x3c] sm:$0xf]
        %v322 = vld [vmem:[#allocation5 + $0x40] sm:$0xf]
        %v323 = vld [vmem:[#allocation5 + $0x44] sm:$0xf]
        %v324 = vld [vmem:[#allocation5 + $0x48] sm:$0xf]
        %v325 = vld [vmem:[#allocation5 + $0x4c] sm:$0xf]
        %v326 = vld [vmem:[#allocation5 + $0x50] sm:$0xf]
        %v327 = vld [vmem:[#allocation5 + $0x54] sm:$0xf]
        %v328 = vld [vmem:[#allocation5 + $0x58] sm:$0xf]
        %v329 = vld [vmem:[#allocation5 + $0x5c] sm:$0xf]
        %v330 = vld [vmem:[#allocation5 + $0x60] sm:$0xf]
        %v331 = vld [vmem:[#allocation5 + $0x64] sm:$0xf]
        %v332 = vld [vmem:[#allocation5 + $0x68] sm:$0xf]
        %v333 = vld [vmem:[#allocation5 + $0x6c] sm:$0xf]
        %v334 = vld [vmem:[#allocation5 + $0x70] sm:$0xf]
        %v335 = vld [vmem:[#allocation5 + $0x74] sm:$0xf]
        %v336 = vld [vmem:[#allocation5 + $0x78] sm:$0xf]
        %v337 = vld [vmem:[#allocation5 + $0x7c] sm:$0xf]
        %v338 = vld [vmem:[#allocation5 + $0x80] sm:$0xf]
        %v339 = vld [vmem:[#allocation5 + $0x84] sm:$0xf]
        %v340 = vld [vmem:[#allocation5 + $0x88] sm:$0xf]
        %v341 = vld [vmem:[#allocation5 + $0x8c] sm:$0xf]
        %v342 = vld [vmem:[#allocation5 + $0x90] sm:$0xf]
        %v343 = vld [vmem:[#allocation5 + $0x94] sm:$0xf]
        %v344 = vld [vmem:[#allocation5 + $0x98] sm:$0xf]
        %v345 = vld [vmem:[#allocation5 + $0x9c] sm:$0xf]
        %v346 = vld [vmem:[#allocation5 + $0xa0] sm:$0xf]
        %v347 = vld [vmem:[#allocation5 + $0xa4] sm:$0xf]
        %v348 = vld [vmem:[#allocation5 + $0xa8] sm:$0xf]
        %v349 = vld [vmem:[#allocation5 + $0xac] sm:$0xf]
        %v350 = vld [vmem:[#allocation5 + $0xb0] sm:$0xf]
        %v351 = vld [vmem:[#allocation5 + $0xb4] sm:$0xf]
        %v352 = vld [vmem:[#allocation5 + $0xb8] sm:$0xf]
        %v353 = vld [vmem:[#allocation5 + $0xbc] sm:$0xf]
        %v354 = vld [vmem:[#allocation5 + $0xc0] sm:$0xf]
        %v355 = vld [vmem:[#allocation5 + $0xc4] sm:$0xf]
        %v356 = vld [vmem:[#allocation5 + $0xc8] sm:$0xf]
        %v357 = vld [vmem:[#allocation5 + $0xcc] sm:$0xf]
        %v358 = vld [vmem:[#allocation5 + $0xd0] sm:$0xf]
        %v359 = vld [vmem:[#allocation5 + $0xd4] sm:$0xf]
        %v360 = vld [vmem:[#allocation5 + $0xd8] sm:$0xf]
        %v361 = vld [vmem:[#allocation5 + $0xdc] sm:$0xf]
        %v362 = vld [vmem:[#allocation5 + $0xe0] sm:$0xf]
        %v363 = vld [vmem:[#allocation5 + $0xe4] sm:$0xf]
        %v364 = vld [vmem:[#allocation5 + $0xe8] sm:$0xf]
        %v365 = vld [vmem:[#allocation5 + $0xec] sm:$0xf]
        %v366 = vld [vmem:[#allocation5 + $0xf0] sm:$0xf]
        %v367 = vld [vmem:[#allocation5 + $0xf4] sm:$0xf]
        %v368 = vld [vmem:[#allocation5 + $0xf8] sm:$0xf]
        %v369 = vld [vmem:[#allocation5 + $0xfc] sm:$0xf]
        %v370 = vld [vmem:[#allocation5 + $0x100] sm:$0xf]
        %v371 = vld [vmem:[#allocation5 + $0x104] sm:$0xf]
        %v372 = vld [vmem:[#allocation5 + $0x108] sm:$0xf]
        %v373 = vld [vmem:[#allocation5 + $0x10c] sm:$0xf]
        %v374 = vld [vmem:[#allocation5 + $0x110] sm:$0xf]
        %v375 = vld [vmem:[#allocation5 + $0x114] sm:$0xf]
        %v376 = vld [vmem:[#allocation5 + $0x118] sm:$0xf]
        %v377 = vld [vmem:[#allocation5 + $0x11c] sm:$0xf]
        %v378 = vld [vmem:[#allocation5 + $0x120] sm:$0xf]
        %v379 = vld [vmem:[#allocation5 + $0x124] sm:$0xf]
        %v380 = vld [vmem:[#allocation5 + $0x128] sm:$0xf]
        %v381 = vld [vmem:[#allocation5 + $0x12c] sm:$0xf]
        %v382 = vld [vmem:[#allocation5 + $0x130] sm:$0xf]
        %v383 = vld [vmem:[#allocation5 + $0x134] sm:$0xf]
        %v384 = vld [vmem:[#allocation5 + $0x138] sm:$0xf]
        %v385 = vld [vmem:[#allocation5 + $0x13c] sm:$0xf]
        %v386 = vld [vmem:[#allocation5 + $0x140] sm:$0xf]
        %v387 = vld [vmem:[#allocation5 + $0x144] sm:$0xf]
        %v388 = vld [vmem:[#allocation5 + $0x148] sm:$0xf]
        %v389 = vld [vmem:[#allocation5 + $0x14c] sm:$0xf]
        %v390 = vld [vmem:[#allocation5 + $0x150] sm:$0xf]
        %v391 = vld [vmem:[#allocation5 + $0x154] sm:$0xf]
        %v392 = vld [vmem:[#allocation5 + $0x158] sm:$0xf]
        %v393 = vld [vmem:[#allocation5 + $0x15c] sm:$0xf]
        %v394 = vld [vmem:[#allocation5 + $0x160] sm:$0xf]
        %v395 = vld [vmem:[#allocation5 + $0x164] sm:$0xf]
        %v396 = vld [vmem:[#allocation5 + $0x168] sm:$0xf]
        %v397 = vld [vmem:[#allocation5 + $0x16c] sm:$0xf]
        %v398 = vld [vmem:[#allocation5 + $0x170] sm:$0xf]
        %v399 = vld [vmem:[#allocation5 + $0x174] sm:$0xf]
        %v400 = vld [vmem:[#allocation5 + $0x178] sm:$0xf]
        %v401 = vld [vmem:[#allocation5 + $0x17c] sm:$0xf]
        %v402 = vld [vmem:[#allocation5 + $0x180] sm:$0xf]
        %v403 = vld [vmem:[#allocation5 + $0x184] sm:$0xf]
        %v404 = vld [vmem:[#allocation5 + $0x188] sm:$0xf]
        %v405 = vld [vmem:[#allocation5 + $0x18c] sm:$0xf]
        %v406 = vld [vmem:[#allocation5 + $0x190] sm:$0xf]
        %v407 = vld [vmem:[#allocation5 + $0x194] sm:$0xf]
        %v408 = vld [vmem:[#allocation5 + $0x198] sm:$0xf]
        %v409 = vld [vmem:[#allocation5 + $0x19c] sm:$0xf]
        %v410 = vld [vmem:[#allocation5 + $0x1a0] sm:$0xf]
        %v411 = vld [vmem:[#allocation5 + $0x1a4] sm:$0xf]
        %v412 = vld [vmem:[#allocation5 + $0x1a8] sm:$0xf]
        %v413 = vld [vmem:[#allocation5 + $0x1ac] sm:$0xf]
        %v414 = vld [vmem:[#allocation5 + $0x1b0] sm:$0xf]
        %v415 = vld [vmem:[#allocation5 + $0x1b4] sm:$0xf]
        %v416 = vld [vmem:[#allocation5 + $0x1b8] sm:$0xf]
        %v417 = vld [vmem:[#allocation5 + $0x1bc] sm:$0xf]
        %v418 = vld [vmem:[#allocation5 + $0x1c0] sm:$0xf]
        %v419 = vld [vmem:[#allocation5 + $0x1c4] sm:$0xf]
        %v420 = vld [vmem:[#allocation5 + $0x1c8] sm:$0xf]
        %v421 = vld [vmem:[#allocation5 + $0x1cc] sm:$0xf]
        %v422 = vld [vmem:[#allocation5 + $0x1d0] sm:$0xf]
        %v423 = vld [vmem:[#allocation5 + $0x1d4] sm:$0xf]
        %v424 = vld [vmem:[#allocation5 + $0x1d8] sm:$0xf]
        %v425 = vld [vmem:[#allocation5 + $0x1dc] sm:$0xf]
        %v426 = vld [vmem:[#allocation5 + $0x1e0] sm:$0xf]
        %v427 = vld [vmem:[#allocation5 + $0x1e4] sm:$0xf]
        %v428 = vld [vmem:[#allocation5 + $0x1e8] sm:$0xf]
        %v429 = vld [vmem:[#allocation5 + $0x1ec] sm:$0xf]
        %v430 = vld [vmem:[#allocation5 + $0x1f0] sm:$0xf]
        %v431 = vld [vmem:[#allocation5 + $0x1f4] sm:$0xf]
        %v432 = vld [vmem:[#allocation5 + $0x1f8] sm:$0xf]
        %v433 = vld [vmem:[#allocation5 + $0x1fc] sm:$0xf]
        %v434 = vld [vmem:[#allocation5 + $0x200] sm:$0xf]
        %v435 = vld [vmem:[#allocation5 + $0x204] sm:$0xf]
        %v436 = vld [vmem:[#allocation5 + $0x208] sm:$0xf]
        %v437 = vld [vmem:[#allocation5 + $0x20c] sm:$0xf]
        %v438 = vld [vmem:[#allocation5 + $0x210] sm:$0xf]
        %v439 = vld [vmem:[#allocation5 + $0x214] sm:$0xf]
        %v440 = vld [vmem:[#allocation5 + $0x218] sm:$0xf]
        %v441 = vld [vmem:[#allocation5 + $0x21c] sm:$0xf]
        %v442 = vld [vmem:[#allocation5 + $0x220] sm:$0xf]
        %v443 = vld [vmem:[#allocation5 + $0x224] sm:$0xf]
        %v444 = vld [vmem:[#allocation5 + $0x228] sm:$0xf]
        %v445 = vld [vmem:[#allocation5 + $0x22c] sm:$0xf]
        %v446 = vld [vmem:[#allocation5 + $0x230] sm:$0xf]
        %v447 = vld [vmem:[#allocation5 + $0x234] sm:$0xf]
        %v448 = vld [vmem:[#allocation5 + $0x238] sm:$0xf]
        %v449 = vld [vmem:[#allocation5 + $0x23c] sm:$0xf]
        %v450 = vld [vmem:[#allocation5 + $0x240] sm:$0xf]
        %v451 = vld [vmem:[#allocation5 + $0x244] sm:$0xf]
        %v452 = vld [vmem:[#allocation5 + $0x248] sm:$0xf]
        %v453 = vld [vmem:[#allocation5 + $0x24c] sm:$0xf]
        %v454 = vld [vmem:[#allocation5 + $0x250] sm:$0xf]
        %v455 = vld [vmem:[#allocation5 + $0x254] sm:$0xf]
        %v456 = vld [vmem:[#allocation5 + $0x258] sm:$0xf]
        %v457 = vld [vmem:[#allocation5 + $0x25c] sm:$0xf]
        %v458 = vld [vmem:[#allocation5 + $0x260] sm:$0xf]
        %v459 = vld [vmem:[#allocation5 + $0x264] sm:$0xf]
        %v460 = vld [vmem:[#allocation5 + $0x268] sm:$0xf]
        %v461 = vld [vmem:[#allocation5 + $0x26c] sm:$0xf]
        %v462 = vld [vmem:[#allocation5 + $0x270] sm:$0xf]
        %v463 = vld [vmem:[#allocation5 + $0x274] sm:$0xf]
        %v464 = vld [vmem:[#allocation5 + $0x278] sm:$0xf]
        %v465 = vld [vmem:[#allocation5 + $0x27c] sm:$0xf]
        %v466 = vld [vmem:[#allocation5 + $0x280] sm:$0xf]
        %v467 = vld [vmem:[#allocation5 + $0x284] sm:$0xf]
        %v468 = vld [vmem:[#allocation5 + $0x288] sm:$0xf]
        %v469 = vld [vmem:[#allocation5 + $0x28c] sm:$0xf]
        %v470 = vld [vmem:[#allocation5 + $0x290] sm:$0xf]
        %v471 = vld [vmem:[#allocation5 + $0x294] sm:$0xf]
        %v472 = vld [vmem:[#allocation5 + $0x298] sm:$0xf]
        %v473 = vld [vmem:[#allocation5 + $0x29c] sm:$0xf]
        %v474 = vld [vmem:[#allocation5 + $0x2a0] sm:$0xf]
        %v475 = vld [vmem:[#allocation5 + $0x2a4] sm:$0xf]
        %v476 = vld [vmem:[#allocation5 + $0x2a8] sm:$0xf]
        %v477 = vld [vmem:[#allocation5 + $0x2ac] sm:$0xf]
        %v478 = vld [vmem:[#allocation5 + $0x2b0] sm:$0xf]
        %v479 = vld [vmem:[#allocation5 + $0x2b4] sm:$0xf]
        %v480 = vld [vmem:[#allocation5 + $0x2b8] sm:$0xf]
        %v481 = vld [vmem:[#allocation5 + $0x2bc] sm:$0xf]
        %v482 = vld [vmem:[#allocation5 + $0x2c0] sm:$0xf]
        %v483 = vld [vmem:[#allocation5 + $0x2c4] sm:$0xf]
        %v484 = vld [vmem:[#allocation5 + $0x2c8] sm:$0xf]
        %v485 = vld [vmem:[#allocation5 + $0x2cc] sm:$0xf]
        %v486 = vld [vmem:[#allocation5 + $0x2d0] sm:$0xf]
        %v487 = vld [vmem:[#allocation5 + $0x2d4] sm:$0xf]
        %v488 = vld [vmem:[#allocation5 + $0x2d8] sm:$0xf]
        %v489 = vld [vmem:[#allocation5 + $0x2dc] sm:$0xf]
        %v490 = vld [vmem:[%s2] sm:$0x1]
        %v492 = vperm.slane %v490, 0
        %v518 = vunpack.c.l.b16 %v282
        %v519 = vunpack.c.h.b16 %v282
        %v520 = vunpack.c.l.b16 %v283
        %v521 = vunpack.c.h.b16 %v283
        %v522 = vunpack.c.l.b16 %v284
        %v523 = vunpack.c.h.b16 %v284
        %v524 = vunpack.c.l.b16 %v285
        %v525 = vunpack.c.h.b16 %v285
        %v526 = vunpack.c.l.b16 %v286
        %v527 = vunpack.c.h.b16 %v286
        %v528 = vunpack.c.l.b16 %v287
        %v529 = vunpack.c.h.b16 %v287
        %v530 = vunpack.c.l.b16 %v288
        %v531 = vunpack.c.h.b16 %v288
        %v532 = vunpack.c.l.b16 %v289
        %v533 = vunpack.c.h.b16 %v289
        %v534 = vunpack.c.l.b16 %v290
        %v535 = vunpack.c.h.b16 %v290
        %v536 = vunpack.c.l.b16 %v291
        %v537 = vunpack.c.h.b16 %v291
        %v538 = vunpack.c.l.b16 %v292
        %v539 = vunpack.c.h.b16 %v292
        %v540 = vunpack.c.l.b16 %v293
        %v541 = vunpack.c.h.b16 %v293
        %v542 = vunpack.c.l.b16 %v294
        %v543 = vunpack.c.h.b16 %v294
        %v544 = vunpack.c.l.b16 %v295
        %v545 = vunpack.c.h.b16 %v295
        %v546 = vunpack.c.l.b16 %v296
        %v547 = vunpack.c.h.b16 %v296
        %v548 = vunpack.c.l.b16 %v297
        %v549 = vunpack.c.h.b16 %v297
        %v550 = vunpack.c.l.b16 %v298
        %v551 = vunpack.c.h.b16 %v298
        %v552 = vunpack.c.l.b16 %v299
        %v553 = vunpack.c.h.b16 %v299
        %v554 = vunpack.c.l.b16 %v300
        %v555 = vunpack.c.h.b16 %v300
        %v556 = vunpack.c.l.b16 %v301
        %v557 = vunpack.c.h.b16 %v301
        %v558 = vunpack.c.l.b16 %v302
        %v559 = vunpack.c.h.b16 %v302
        %v560 = vunpack.c.l.b16 %v303
        %v561 = vunpack.c.h.b16 %v303
        %v562 = vunpack.c.l.b16 %v304
        %v563 = vunpack.c.h.b16 %v304
        %v564 = vunpack.c.l.b16 %v305
        %v565 = vunpack.c.h.b16 %v305
        %v566 = vpack.c.b16 %v530, %v518
        %v567 = vpack.c.b16 %v531, %v519
        %v568 = vpack.c.b16 %v532, %v520
        %v569 = vpack.c.b16 %v533, %v521
        %v570 = vpack.c.b16 %v534, %v522
        %v571 = vpack.c.b16 %v535, %v523
        %v572 = vpack.c.b16 %v536, %v524
        %v573 = vpack.c.b16 %v537, %v525
        %v574 = vpack.c.b16 %v538, %v526
        %v575 = vpack.c.b16 %v539, %v527
        %v576 = vpack.c.b16 %v540, %v528
        %v577 = vpack.c.b16 %v541, %v529
        %v578 = vpack.c.b16 %v554, %v542
        %v579 = vpack.c.b16 %v555, %v543
        %v580 = vpack.c.b16 %v556, %v544
        %v581 = vpack.c.b16 %v557, %v545
        %v582 = vpack.c.b16 %v558, %v546
        %v583 = vpack.c.b16 %v559, %v547
        %v584 = vpack.c.b16 %v560, %v548
        %v585 = vpack.c.b16 %v561, %v549
        %v586 = vpack.c.b16 %v562, %v550
        %v587 = vpack.c.b16 %v563, %v551
        %v588 = vpack.c.b16 %v564, %v552
        %v589 = vpack.c.b16 %v565, %v553
        %v796 = vunpack.c.l.b16 %v306
        %v797 = vunpack.c.l.b16 %v307
        %v798 = vunpack.c.l.b16 %v308
        %v799 = vunpack.c.l.b16 %v309
        %v800 = vunpack.c.l.b16 %v310
        %v801 = vunpack.c.l.b16 %v311
        %v802 = vunpack.c.l.b16 %v312
        %v803 = vunpack.c.l.b16 %v313
        %v804 = vunpack.c.l.b16 %v314
        %v805 = vunpack.c.l.b16 %v315
        %v806 = vunpack.c.l.b16 %v316
        %v807 = vunpack.c.l.b16 %v317
        %v808 = vunpack.c.l.b16 %v318
        %v809 = vunpack.c.l.b16 %v319
        %v810 = vunpack.c.l.b16 %v320
        %v811 = vunpack.c.l.b16 %v321
        %v812 = vunpack.c.l.b16 %v322
        %v813 = vunpack.c.l.b16 %v323
        %v814 = vunpack.c.l.b16 %v324
        %v815 = vunpack.c.l.b16 %v325
        %v816 = vunpack.c.l.b16 %v326
        %v817 = vunpack.c.l.b16 %v327
        %v818 = vunpack.c.l.b16 %v328
        %v819 = vunpack.c.l.b16 %v329
        %v820 = vunpack.c.l.b16 %v330
        %v821 = vunpack.c.l.b16 %v331
        %v822 = vunpack.c.l.b16 %v332
        %v823 = vunpack.c.l.b16 %v333
        %v824 = vunpack.c.l.b16 %v334
        %v825 = vunpack.c.l.b16 %v335
        %v826 = vunpack.c.l.b16 %v336
        %v827 = vunpack.c.l.b16 %v337
        %v828 = vunpack.c.l.b16 %v338
        %v829 = vunpack.c.l.b16 %v339
        %v830 = vunpack.c.l.b16 %v340
        %v831 = vunpack.c.l.b16 %v341
        %v832 = vunpack.c.l.b16 %v342
        %v833 = vunpack.c.l.b16 %v343
        %v834 = vunpack.c.l.b16 %v344
        %v835 = vunpack.c.l.b16 %v345
        %v836 = vunpack.c.l.b16 %v346
        %v837 = vunpack.c.l.b16 %v347
        %v838 = vunpack.c.l.b16 %v348
        %v839 = vunpack.c.l.b16 %v349
        %v840 = vunpack.c.l.b16 %v350
        %v841 = vunpack.c.l.b16 %v351
        %v842 = vunpack.c.l.b16 %v352
        %v843 = vunpack.c.l.b16 %v353
        %v844 = vunpack.c.l.b16 %v354
        %v845 = vunpack.c.l.b16 %v355
        %v846 = vunpack.c.l.b16 %v356
        %v847 = vunpack.c.l.b16 %v357
        %v848 = vunpack.c.l.b16 %v358
        %v849 = vunpack.c.l.b16 %v359
        %v850 = vunpack.c.l.b16 %v360
        %v851 = vunpack.c.l.b16 %v361
        %v852 = vunpack.c.l.b16 %v362
        %v853 = vunpack.c.l.b16 %v363
        %v854 = vunpack.c.l.b16 %v364
        %v855 = vunpack.c.l.b16 %v365
        %v856 = vunpack.c.l.b16 %v366
        %v857 = vunpack.c.l.b16 %v367
        %v858 = vunpack.c.l.b16 %v368
        %v859 = vunpack.c.l.b16 %v369
        %v860 = vunpack.c.l.b16 %v370
        %v861 = vunpack.c.l.b16 %v371
        %v862 = vunpack.c.l.b16 %v372
        %v863 = vunpack.c.l.b16 %v373
        %v864 = vunpack.c.l.b16 %v374
        %v865 = vunpack.c.l.b16 %v375
        %v866 = vunpack.c.l.b16 %v376
        %v867 = vunpack.c.l.b16 %v377
        %v868 = vunpack.c.l.b16 %v378
        %v869 = vunpack.c.l.b16 %v379
        %v870 = vunpack.c.l.b16 %v380
        %v871 = vunpack.c.l.b16 %v381
        %v872 = vunpack.c.l.b16 %v382
        %v873 = vunpack.c.l.b16 %v383
        %v874 = vunpack.c.l.b16 %v384
        %v875 = vunpack.c.l.b16 %v385
        %v876 = vunpack.c.l.b16 %v386
        %v877 = vunpack.c.l.b16 %v387
        %v878 = vunpack.c.l.b16 %v388
        %v879 = vunpack.c.l.b16 %v389
        %v880 = vunpack.c.l.b16 %v390
        %v881 = vunpack.c.l.b16 %v391
        %v882 = vunpack.c.l.b16 %v392
        %v883 = vunpack.c.l.b16 %v393
        %v884 = vunpack.c.l.b16 %v394
        %v885 = vunpack.c.l.b16 %v395
        %v886 = vunpack.c.l.b16 %v396
        %v887 = vunpack.c.l.b16 %v397
        %v888 = vunpack.c.l.b16 %v398
        %v889 = vunpack.c.l.b16 %v399
        %v890 = vunpack.c.l.b16 %v400
        %v891 = vunpack.c.l.b16 %v401
        %v892 = vunpack.c.l.b16 %v402
        %v893 = vunpack.c.l.b16 %v403
        %v894 = vunpack.c.l.b16 %v404
        %v895 = vunpack.c.l.b16 %v405
        %v896 = vunpack.c.l.b16 %v406
        %v897 = vunpack.c.l.b16 %v407
        %v898 = vunpack.c.l.b16 %v408
        %v899 = vunpack.c.l.b16 %v409
        %v900 = vunpack.c.l.b16 %v410
        %v901 = vunpack.c.l.b16 %v411
        %v902 = vunpack.c.l.b16 %v412
        %v903 = vunpack.c.l.b16 %v413
        %v904 = vunpack.c.l.b16 %v414
        %v905 = vunpack.c.l.b16 %v415
        %v906 = vunpack.c.l.b16 %v416
        %v907 = vunpack.c.l.b16 %v417
        %v908 = vunpack.c.l.b16 %v418
        %v909 = vunpack.c.l.b16 %v419
        %v910 = vunpack.c.l.b16 %v420
        %v911 = vunpack.c.l.b16 %v421
        %v912 = vunpack.c.l.b16 %v422
        %v913 = vunpack.c.l.b16 %v423
        %v914 = vunpack.c.l.b16 %v424
        %v915 = vunpack.c.l.b16 %v425
        %v916 = vunpack.c.l.b16 %v426
        %v917 = vunpack.c.l.b16 %v427
        %v918 = vunpack.c.l.b16 %v428
        %v919 = vunpack.c.l.b16 %v429
        %v920 = vunpack.c.l.b16 %v430
        %v921 = vunpack.c.l.b16 %v431
        %v922 = vunpack.c.l.b16 %v432
        %v923 = vunpack.c.l.b16 %v433
        %v924 = vunpack.c.l.b16 %v434
        %v925 = vunpack.c.l.b16 %v435
        %v926 = vunpack.c.l.b16 %v436
        %v927 = vunpack.c.l.b16 %v437
        %v928 = vunpack.c.l.b16 %v438
        %v929 = vunpack.c.l.b16 %v439
        %v930 = vunpack.c.l.b16 %v440
        %v931 = vunpack.c.l.b16 %v441
        %v932 = vunpack.c.l.b16 %v442
        %v933 = vunpack.c.l.b16 %v443
        %v934 = vunpack.c.l.b16 %v444
        %v935 = vunpack.c.l.b16 %v445
        %v936 = vunpack.c.l.b16 %v446
        %v937 = vunpack.c.l.b16 %v447
        %v938 = vunpack.c.l.b16 %v448
        %v939 = vunpack.c.l.b16 %v449
        %v940 = vunpack.c.l.b16 %v450
        %v941 = vunpack.c.l.b16 %v451
        %v942 = vunpack.c.l.b16 %v452
        %v943 = vunpack.c.l.b16 %v453
        %v944 = vunpack.c.l.b16 %v454
        %v945 = vunpack.c.l.b16 %v455
        %v946 = vunpack.c.l.b16 %v456
        %v947 = vunpack.c.l.b16 %v457
        %v948 = vunpack.c.l.b16 %v458
        %v949 = vunpack.c.l.b16 %v459
        %v950 = vunpack.c.l.b16 %v460
        %v951 = vunpack.c.l.b16 %v461
        %v952 = vunpack.c.l.b16 %v462
        %v953 = vunpack.c.l.b16 %v463
        %v954 = vunpack.c.l.b16 %v464
        %v955 = vunpack.c.l.b16 %v465
        %v956 = vunpack.c.l.b16 %v466
        %v957 = vunpack.c.l.b16 %v467
        %v958 = vunpack.c.l.b16 %v468
        %v959 = vunpack.c.l.b16 %v469
        %v960 = vunpack.c.l.b16 %v470
        %v961 = vunpack.c.l.b16 %v471
        %v962 = vunpack.c.l.b16 %v472
        %v963 = vunpack.c.l.b16 %v473
        %v964 = vunpack.c.l.b16 %v474
        %v965 = vunpack.c.l.b16 %v475
        %v966 = vunpack.c.l.b16 %v476
        %v967 = vunpack.c.l.b16 %v477
        %v968 = vunpack.c.l.b16 %v478
        %v969 = vunpack.c.l.b16 %v479
        %v970 = vunpack.c.l.b16 %v480
        %v971 = vunpack.c.l.b16 %v481
        %v972 = vunpack.c.l.b16 %v482
        %v973 = vunpack.c.l.b16 %v483
        %v974 = vunpack.c.l.b16 %v484
        %v975 = vunpack.c.l.b16 %v485
        %v976 = vunpack.c.l.b16 %v486
        %v977 = vunpack.c.l.b16 %v487
        %v978 = vunpack.c.l.b16 %v488
        %v979 = vunpack.c.l.b16 %v489
        %v980 = vpack.c.b16 %v797, %v796
        %v981 = vpack.c.b16 %v799, %v798
        %v982 = vpack.c.b16 %v801, %v800
        %v983 = vpack.c.b16 %v803, %v802
        %v984 = vpack.c.b16 %v805, %v804
        %v985 = vpack.c.b16 %v807, %v806
        %v986 = vpack.c.b16 %v809, %v808
        %v987 = vpack.c.b16 %v811, %v810
        %v988 = vpack.c.b16 %v813, %v812
        %v989 = vpack.c.b16 %v815, %v814
        %v990 = vpack.c.b16 %v817, %v816
        %v991 = vpack.c.b16 %v819, %v818
        %v992 = vpack.c.b16 %v821, %v820
        %v993 = vpack.c.b16 %v823, %v822
        %v994 = vpack.c.b16 %v825, %v824
        %v995 = vpack.c.b16 %v827, %v826
        %v996 = vpack.c.b16 %v829, %v828
        %v997 = vpack.c.b16 %v831, %v830
        %v998 = vpack.c.b16 %v833, %v832
        %v999 = vpack.c.b16 %v835, %v834
        %v1000 = vpack.c.b16 %v837, %v836
        %v1001 = vpack.c.b16 %v839, %v838
        %v1002 = vpack.c.b16 %v841, %v840
        %v1003 = vpack.c.b16 %v843, %v842
        %v1004 = vpack.c.b16 %v845, %v844
        %v1005 = vpack.c.b16 %v847, %v846
        %v1006 = vpack.c.b16 %v849, %v848
        %v1007 = vpack.c.b16 %v851, %v850
        %v1008 = vpack.c.b16 %v853, %v852
        %v1009 = vpack.c.b16 %v855, %v854
        %v1010 = vpack.c.b16 %v857, %v856
        %v1011 = vpack.c.b16 %v859, %v858
        %v1012 = vpack.c.b16 %v861, %v860
        %v1013 = vpack.c.b16 %v863, %v862
        %v1014 = vpack.c.b16 %v865, %v864
        %v1015 = vpack.c.b16 %v867, %v866
        %v1016 = vpack.c.b16 %v869, %v868
        %v1017 = vpack.c.b16 %v871, %v870
        %v1018 = vpack.c.b16 %v873, %v872
        %v1019 = vpack.c.b16 %v875, %v874
        %v1020 = vpack.c.b16 %v877, %v876
        %v1021 = vpack.c.b16 %v879, %v878
        %v1022 = vpack.c.b16 %v881, %v880
        %v1023 = vpack.c.b16 %v883, %v882
        %v1024 = vpack.c.b16 %v885, %v884
        %v1025 = vpack.c.b16 %v887, %v886
        %v1026 = vpack.c.b16 %v889, %v888
        %v1027 = vpack.c.b16 %v891, %v890
        %v1028 = vpack.c.b16 %v893, %v892
        %v1029 = vpack.c.b16 %v895, %v894
        %v1030 = vpack.c.b16 %v897, %v896
        %v1031 = vpack.c.b16 %v899, %v898
        %v1032 = vpack.c.b16 %v901, %v900
        %v1033 = vpack.c.b16 %v903, %v902
        %v1034 = vpack.c.b16 %v905, %v904
        %v1035 = vpack.c.b16 %v907, %v906
        %v1036 = vpack.c.b16 %v909, %v908
        %v1037 = vpack.c.b16 %v911, %v910
        %v1038 = vpack.c.b16 %v913, %v912
        %v1039 = vpack.c.b16 %v915, %v914
        %v1040 = vpack.c.b16 %v917, %v916
        %v1041 = vpack.c.b16 %v919, %v918
        %v1042 = vpack.c.b16 %v921, %v920
        %v1043 = vpack.c.b16 %v923, %v922
        %v1044 = vpack.c.b16 %v925, %v924
        %v1045 = vpack.c.b16 %v927, %v926
        %v1046 = vpack.c.b16 %v929, %v928
        %v1047 = vpack.c.b16 %v931, %v930
        %v1048 = vpack.c.b16 %v933, %v932
        %v1049 = vpack.c.b16 %v935, %v934
        %v1050 = vpack.c.b16 %v937, %v936
        %v1051 = vpack.c.b16 %v939, %v938
        %v1052 = vpack.c.b16 %v941, %v940
        %v1053 = vpack.c.b16 %v943, %v942
        %v1054 = vpack.c.b16 %v945, %v944
        %v1055 = vpack.c.b16 %v947, %v946
        %v1056 = vpack.c.b16 %v949, %v948
        %v1057 = vpack.c.b16 %v951, %v950
        %v1058 = vpack.c.b16 %v953, %v952
        %v1059 = vpack.c.b16 %v955, %v954
        %v1060 = vpack.c.b16 %v957, %v956
        %v1061 = vpack.c.b16 %v959, %v958
        %v1062 = vpack.c.b16 %v961, %v960
        %v1063 = vpack.c.b16 %v963, %v962
        %v1064 = vpack.c.b16 %v965, %v964
        %v1065 = vpack.c.b16 %v967, %v966
        %v1066 = vpack.c.b16 %v969, %v968
        %v1067 = vpack.c.b16 %v971, %v970
        %v1068 = vpack.c.b16 %v973, %v972
        %v1069 = vpack.c.b16 %v975, %v974
        %v1070 = vpack.c.b16 %v977, %v976
        %v1071 = vpack.c.b16 %v979, %v978
        %vm1164 = vcmask 523264
        %v1166 = vsel %vm1164, %v577, 0
        %v1169 = vsel %vm1164, %v589, 0
        %1171 = vmatpush.bf16.msra.mxu0 %v987
        %1172 = vmatpush.bf16.msra.mxu0 %v986
        %1173 = vmatpush.bf16.msra.mxu0 %v985
        %1174 = vmatpush.bf16.msra.mxu0 %v984
        %1175 = vmatpush.bf16.msra.mxu0 %v983
        %1176 = vmatpush.bf16.msra.mxu0 %v982
        %1177 = vmatpush.bf16.msra.mxu0 %v981
        %1178 = vmatpush.bf16.msra.mxu0 %v980
        %1179 = vmatmul.bf16.gmra.mxu0 %v566
        %v1180 = vpop.f32.mrf.mxu0
        %v1181 = vadd.f32 %v492, %v1180
        %v1182 = vpop.f32.mrf.mxu0
        %v1183 = vadd.f32 %v492, %v1182
        %1184 = vmatmul.bf16.gmra.mxu0 %v578
        %v1185 = vpop.f32.mrf.mxu0
        %v1186 = vadd.f32 %v492, %v1185
        %v1187 = vpop.f32.mrf.mxu0
        %v1188 = vadd.f32 %v492, %v1187
        %1189 = vdwg.mxu0
        %1190 = vmatpush.bf16.msra.mxu0 %v995
        %1191 = vmatpush.bf16.msra.mxu0 %v994
        %1192 = vmatpush.bf16.msra.mxu0 %v993
        %1193 = vmatpush.bf16.msra.mxu0 %v992
        %1194 = vmatpush.bf16.msra.mxu0 %v991
        %1195 = vmatpush.bf16.msra.mxu0 %v990
        %1196 = vmatpush.bf16.msra.mxu0 %v989
        %1197 = vmatpush.bf16.msra.mxu0 %v988
        %1198 = vmatmul.bf16.gmra.mxu0 %v567
        %v1199 = vpop.f32.mrf.mxu0
        %v1200 = vadd.f32 %v1181, %v1199
        %v1201 = vpop.f32.mrf.mxu0
        %v1202 = vadd.f32 %v1183, %v1201
        %1203 = vmatmul.bf16.gmra.mxu0 %v579
        %v1204 = vpop.f32.mrf.mxu0
        %v1205 = vadd.f32 %v1186, %v1204
        %v1206 = vpop.f32.mrf.mxu0
        %v1207 = vadd.f32 %v1188, %v1206
        %1208 = vdwg.mxu0
        %1209 = vmatpush.bf16.msra.mxu0 %v1003
        %1210 = vmatpush.bf16.msra.mxu0 %v1002
        %1211 = vmatpush.bf16.msra.mxu0 %v1001
        %1212 = vmatpush.bf16.msra.mxu0 %v1000
        %1213 = vmatpush.bf16.msra.mxu0 %v999
        %1214 = vmatpush.bf16.msra.mxu0 %v998
        %1215 = vmatpush.bf16.msra.mxu0 %v997
        %1216 = vmatpush.bf16.msra.mxu0 %v996
        %1217 = vmatmul.bf16.gmra.mxu0 %v568
        %v1218 = vpop.f32.mrf.mxu0
        %v1219 = vadd.f32 %v1200, %v1218
        %v1220 = vpop.f32.mrf.mxu0
        %v1221 = vadd.f32 %v1202, %v1220
        %1222 = vmatmul.bf16.gmra.mxu0 %v580
        %v1223 = vpop.f32.mrf.mxu0
        %v1224 = vadd.f32 %v1205, %v1223
        %v1225 = vpop.f32.mrf.mxu0
        %v1226 = vadd.f32 %v1207, %v1225
        %1227 = vdwg.mxu0
        %1228 = vmatpush.bf16.msra.mxu0 %v1011
        %1229 = vmatpush.bf16.msra.mxu0 %v1010
        %1230 = vmatpush.bf16.msra.mxu0 %v1009
        %1231 = vmatpush.bf16.msra.mxu0 %v1008
        %1232 = vmatpush.bf16.msra.mxu0 %v1007
        %1233 = vmatpush.bf16.msra.mxu0 %v1006
        %1234 = vmatpush.bf16.msra.mxu0 %v1005
        %1235 = vmatpush.bf16.msra.mxu0 %v1004
        %1236 = vmatmul.bf16.gmra.mxu0 %v569
        %v1237 = vpop.f32.mrf.mxu0
        %v1238 = vadd.f32 %v1219, %v1237
        %v1239 = vpop.f32.mrf.mxu0
        %v1240 = vadd.f32 %v1221, %v1239
        %1241 = vmatmul.bf16.gmra.mxu0 %v581
        %v1242 = vpop.f32.mrf.mxu0
        %v1243 = vadd.f32 %v1224, %v1242
        %v1244 = vpop.f32.mrf.mxu0
        %v1245 = vadd.f32 %v1226, %v1244
        %1246 = vdwg.mxu0
        %1247 = vmatpush.bf16.msra.mxu0 %v1019
        %1248 = vmatpush.bf16.msra.mxu0 %v1018
        %1249 = vmatpush.bf16.msra.mxu0 %v1017
        %1250 = vmatpush.bf16.msra.mxu0 %v1016
        %1251 = vmatpush.bf16.msra.mxu0 %v1015
        %1252 = vmatpush.bf16.msra.mxu0 %v1014
        %1253 = vmatpush.bf16.msra.mxu0 %v1013
        %1254 = vmatpush.bf16.msra.mxu0 %v1012
        %1255 = vmatmul.bf16.gmra.mxu0 %v570
        %v1256 = vpop.f32.mrf.mxu0
        %v1257 = vadd.f32 %v1238, %v1256
        %v1258 = vpop.f32.mrf.mxu0
        %v1259 = vadd.f32 %v1240, %v1258
        %1260 = vmatmul.bf16.gmra.mxu0 %v582
        %v1261 = vpop.f32.mrf.mxu0
        %v1262 = vadd.f32 %v1243, %v1261
        %v1263 = vpop.f32.mrf.mxu0
        %v1264 = vadd.f32 %v1245, %v1263
        %1265 = vdwg.mxu0
        %1266 = vmatpush.bf16.msra.mxu0 %v1027
        %1267 = vmatpush.bf16.msra.mxu0 %v1026
        %1268 = vmatpush.bf16.msra.mxu0 %v1025
        %1269 = vmatpush.bf16.msra.mxu0 %v1024
        %1270 = vmatpush.bf16.msra.mxu0 %v1023
        %1271 = vmatpush.bf16.msra.mxu0 %v1022
        %1272 = vmatpush.bf16.msra.mxu0 %v1021
        %1273 = vmatpush.bf16.msra.mxu0 %v1020
        %1274 = vmatmul.bf16.gmra.mxu0 %v571
        %v1275 = vpop.f32.mrf.mxu0
        %v1276 = vadd.f32 %v1257, %v1275
        %v1277 = vpop.f32.mrf.mxu0
        %v1278 = vadd.f32 %v1259, %v1277
        %1279 = vmatmul.bf16.gmra.mxu0 %v583
        %v1280 = vpop.f32.mrf.mxu0
        %v1281 = vadd.f32 %v1262, %v1280
        %v1282 = vpop.f32.mrf.mxu0
        %v1283 = vadd.f32 %v1264, %v1282
        %1284 = vdwg.mxu0
        %1285 = vmatpush.bf16.msra.mxu0 %v1035
        %1286 = vmatpush.bf16.msra.mxu0 %v1034
        %1287 = vmatpush.bf16.msra.mxu0 %v1033
        %1288 = vmatpush.bf16.msra.mxu0 %v1032
        %1289 = vmatpush.bf16.msra.mxu0 %v1031
        %1290 = vmatpush.bf16.msra.mxu0 %v1030
        %1291 = vmatpush.bf16.msra.mxu0 %v1029
        %1292 = vmatpush.bf16.msra.mxu0 %v1028
        %1293 = vmatmul.bf16.gmra.mxu0 %v572
        %v1294 = vpop.f32.mrf.mxu0
        %v1295 = vadd.f32 %v1276, %v1294
        %v1296 = vpop.f32.mrf.mxu0
        %v1297 = vadd.f32 %v1278, %v1296
        %1298 = vmatmul.bf16.gmra.mxu0 %v584
        %v1299 = vpop.f32.mrf.mxu0
        %v1300 = vadd.f32 %v1281, %v1299
        %v1301 = vpop.f32.mrf.mxu0
        %v1302 = vadd.f32 %v1283, %v1301
        %1303 = vdwg.mxu0
        %1304 = vmatpush.bf16.msra.mxu0 %v1043
        %1305 = vmatpush.bf16.msra.mxu0 %v1042
        %1306 = vmatpush.bf16.msra.mxu0 %v1041
        %1307 = vmatpush.bf16.msra.mxu0 %v1040
        %1308 = vmatpush.bf16.msra.mxu0 %v1039
        %1309 = vmatpush.bf16.msra.mxu0 %v1038
        %1310 = vmatpush.bf16.msra.mxu0 %v1037
        %1311 = vmatpush.bf16.msra.mxu0 %v1036
        %1312 = vmatmul.bf16.gmra.mxu0 %v573
        %v1313 = vpop.f32.mrf.mxu0
        %v1314 = vadd.f32 %v1295, %v1313
        %v1315 = vpop.f32.mrf.mxu0
        %v1316 = vadd.f32 %v1297, %v1315
        %1317 = vmatmul.bf16.gmra.mxu0 %v585
        %v1318 = vpop.f32.mrf.mxu0
        %v1319 = vadd.f32 %v1300, %v1318
        %v1320 = vpop.f32.mrf.mxu0
        %v1321 = vadd.f32 %v1302, %v1320
        %1322 = vdwg.mxu0
        %1323 = vmatpush.bf16.msra.mxu0 %v1051
        %1324 = vmatpush.bf16.msra.mxu0 %v1050
        %1325 = vmatpush.bf16.msra.mxu0 %v1049
        %1326 = vmatpush.bf16.msra.mxu0 %v1048
        %1327 = vmatpush.bf16.msra.mxu0 %v1047
        %1328 = vmatpush.bf16.msra.mxu0 %v1046
        %1329 = vmatpush.bf16.msra.mxu0 %v1045
        %1330 = vmatpush.bf16.msra.mxu0 %v1044
        %1331 = vmatmul.bf16.gmra.mxu0 %v574
        %v1332 = vpop.f32.mrf.mxu0
        %v1333 = vadd.f32 %v1314, %v1332
        %v1334 = vpop.f32.mrf.mxu0
        %v1335 = vadd.f32 %v1316, %v1334
        %1336 = vmatmul.bf16.gmra.mxu0 %v586
        %v1337 = vpop.f32.mrf.mxu0
        %v1338 = vadd.f32 %v1319, %v1337
        %v1339 = vpop.f32.mrf.mxu0
        %v1340 = vadd.f32 %v1321, %v1339
        %1341 = vdwg.mxu0
        %1342 = vmatpush.bf16.msra.mxu0 %v1059
        %1343 = vmatpush.bf16.msra.mxu0 %v1058
        %1344 = vmatpush.bf16.msra.mxu0 %v1057
        %1345 = vmatpush.bf16.msra.mxu0 %v1056
        %1346 = vmatpush.bf16.msra.mxu0 %v1055
        %1347 = vmatpush.bf16.msra.mxu0 %v1054
        %1348 = vmatpush.bf16.msra.mxu0 %v1053
        %1349 = vmatpush.bf16.msra.mxu0 %v1052
        %1350 = vmatmul.bf16.gmra.mxu0 %v575
        %v1351 = vpop.f32.mrf.mxu0
        %v1352 = vadd.f32 %v1333, %v1351
        %v1353 = vpop.f32.mrf.mxu0
        %v1354 = vadd.f32 %v1335, %v1353
        %1355 = vmatmul.bf16.gmra.mxu0 %v587
        %v1356 = vpop.f32.mrf.mxu0
        %v1357 = vadd.f32 %v1338, %v1356
        %v1358 = vpop.f32.mrf.mxu0
        %v1359 = vadd.f32 %v1340, %v1358
        %1360 = vdwg.mxu0
        %1361 = vmatpush.bf16.msra.mxu0 %v1067
        %1362 = vmatpush.bf16.msra.mxu0 %v1066
        %1363 = vmatpush.bf16.msra.mxu0 %v1065
        %1364 = vmatpush.bf16.msra.mxu0 %v1064
        %1365 = vmatpush.bf16.msra.mxu0 %v1063
        %1366 = vmatpush.bf16.msra.mxu0 %v1062
        %1367 = vmatpush.bf16.msra.mxu0 %v1061
        %1368 = vmatpush.bf16.msra.mxu0 %v1060
        %1369 = vmatmul.bf16.gmra.mxu0 %v576
        %v1370 = vpop.f32.mrf.mxu0
        %v1371 = vadd.f32 %v1352, %v1370
        %v1372 = vpop.f32.mrf.mxu0
        %v1373 = vadd.f32 %v1354, %v1372
        %1374 = vmatmul.bf16.gmra.mxu0 %v588
        %v1375 = vpop.f32.mrf.mxu0
        %v1376 = vadd.f32 %v1357, %v1375
        %v1377 = vpop.f32.mrf.mxu0
        %v1378 = vadd.f32 %v1359, %v1377
        %1379 = vdwg.mxu0
        %1380 = vmatpush.bf16.msra.mxu0 0
        %1381 = vmatpush.bf16.msra.mxu0 0
        %1382 = vmatpush.bf16.msra.mxu0 0
        %1383 = vmatpush.bf16.msra.mxu0 0
        %1384 = vmatpush.bf16.msra.mxu0 %v1071
        %1385 = vmatpush.bf16.msra.mxu0 %v1070
        %1386 = vmatpush.bf16.msra.mxu0 %v1069
        %1387 = vmatpush.bf16.msra.mxu0 %v1068
        %1388 = vmatmul.bf16.gmra.mxu0 %v1166
        %v1389 = vpop.f32.mrf.mxu0
        %v1390 = vadd.f32 %v1371, %v1389
        %v1391 = vpop.f32.mrf.mxu0
        %v1392 = vadd.f32 %v1373, %v1391
        %1393 = vmatmul.bf16.gmra.mxu0 %v1169
        %v1394 = vpop.f32.mrf.mxu0
        %v1395 = vadd.f32 %v1376, %v1394
        %v1396 = vpop.f32.mrf.mxu0
        %v1397 = vadd.f32 %v1378, %v1396
        %1398 = vdwg.mxu0
        %v1399 = vmax.f32 %v1390, 0.0
        %v1400 = vmax.f32 %v1392, 0.0
        %v1401 = vmax.f32 %v1395, 0.0
        %v1402 = vmax.f32 %v1397, 0.0
        %v1403 = vld [vmem:[#allocation7] sm:$0xff]
        %v1404 = vld [vmem:[#allocation7 + $0x8] sm:$0xff]
        %v1405 = vld [vmem:[#allocation7 + $0x10] sm:$0xff]
        %v1406 = vld [vmem:[#allocation7 + $0x18] sm:$0xff]
        %v1407 = vld [vmem:[#allocation7 + $0x20] sm:$0xff]
        %v1408 = vld [vmem:[#allocation7 + $0x28] sm:$0xff]
        %v1409 = vld [vmem:[#allocation7 + $0x30] sm:$0xff]
        %v1410 = vld [vmem:[#allocation7 + $0x38] sm:$0xff]
        %v1411 = vld [vmem:[#allocation7 + $0x40] sm:$0xff]
        %v1412 = vld [vmem:[#allocation7 + $0x48] sm:$0xff]
        %v1413 = vld [vmem:[#allocation7 + $0x50] sm:$0xff]
        %v1414 = vld [vmem:[#allocation7 + $0x58] sm:$0xff]
        %v1415 = vld [vmem:[#allocation7 + $0x60] sm:$0xff]
        %v1416 = vld [vmem:[#allocation7 + $0x68] sm:$0xff]
        %v1417 = vld [vmem:[#allocation7 + $0x70] sm:$0xff]
        %v1418 = vld [vmem:[#allocation7 + $0x78] sm:$0xff]
        %v1419 = vld [vmem:[%s4] sm:$0x1]
        %v1421 = vperm.slane %v1419, 0
        %1423 = vmatpush.msra.mxu0 %v1418
        %1424 = vmatpush.msra.mxu0 %v1417
        %1425 = vmatpush.msra.mxu0 %v1416
        %1426 = vmatpush.msra.mxu0 %v1415
        %1427 = vmatpush.msra.mxu0 %v1414
        %1428 = vmatpush.msra.mxu0 %v1413
        %1429 = vmatpush.msra.mxu0 %v1412
        %1430 = vmatpush.msra.mxu0 %v1411
        %1431 = vmatpush.msra.mxu0 %v1410
        %1432 = vmatpush.msra.mxu0 %v1409
        %1433 = vmatpush.msra.mxu0 %v1408
        %1434 = vmatpush.msra.mxu0 %v1407
        %1435 = vmatpush.msra.mxu0 %v1406
        %1436 = vmatpush.msra.mxu0 %v1405
        %1437 = vmatpush.msra.mxu0 %v1404
        %1438 = vmatpush.msra.mxu0 %v1403
        %1439 = vmatmul.f32.gmra.mxu0 %v1399
        %v1440 = vpop.f32.mrf.mxu0
        %v1441 = vadd.f32 %v1421, %v1440
        %1442 = vmatmul.f32.gmra.mxu0 %v1400
        %v1443 = vpop.f32.mrf.mxu0
        %v1444 = vadd.f32 %v1421, %v1443
        %1445 = vmatmul.f32.gmra.mxu0 %v1401
        %v1446 = vpop.f32.mrf.mxu0
        %v1447 = vadd.f32 %v1421, %v1446
        %1448 = vmatmul.f32.gmra.mxu0 %v1402
        %v1449 = vpop.f32.mrf.mxu0
        %v1450 = vadd.f32 %v1421, %v1449
        %1451 = vdwg.mxu0
        %1452 = vmax.xlane.f32.xlu0 %v1441
        %v1453 = vpop.xlane.xlu0 %1452
        %1454 = vmax.xlane.f32.xlu0 %v1444
        %v1455 = vpop.xlane.xlu0 %1454
        %1456 = vmax.xlane.f32.xlu0 %v1447
        %v1457 = vpop.xlane.xlu0 %1456
        %1458 = vmax.xlane.f32.xlu0 %v1450
        %v1459 = vpop.xlane.xlu0 %1458
        %v1460 = vsub.f32 %v1441, %v1453
        %v1461 = vsub.f32 %v1444, %v1455
        %v1462 = vsub.f32 %v1447, %v1457
        %v1463 = vsub.f32 %v1450, %v1459
        %v1464 = vmul.f32 %v1460, 1.442695
        %v1465 = vpow.pop %v1464
        %v1466 = vmul.f32 %v1461, 1.442695
        %v1467 = vpow.pop %v1466
        %v1468 = vmul.f32 %v1462, 1.442695
        %v1469 = vpow.pop %v1468
        %v1470 = vmul.f32 %v1463, 1.442695
        %v1471 = vpow.pop %v1470
        %1472 = vadd.xlane.f32.xlu0 %v1465
        %v1473 = vpop.xlane.xlu0 %1472
        %1474 = vadd.xlane.f32.xlu0 %v1467
        %v1475 = vpop.xlane.xlu0 %1474
        %1476 = vadd.xlane.f32.xlu0 %v1469
        %v1477 = vpop.xlane.xlu0 %1476
        %1478 = vadd.xlane.f32.xlu0 %v1471
        %v1479 = vpop.xlane.xlu0 %1478
        %v1480 = vlog2.pop %v1473
        %v1481 = vmul.f32 %v1480, 0.6931472
        %v1482 = vlog2.pop %v1475
        %v1483 = vmul.f32 %v1482, 0.6931472
        %v1484 = vlog2.pop %v1477
        %v1485 = vmul.f32 %v1484, 0.6931472
        %v1486 = vlog2.pop %v1479
        %v1487 = vmul.f32 %v1486, 0.6931472
        %v1488 = vsub.f32 %v1460, %v1481
        %v1489 = vsub.f32 %v1461, %v1483
        %v1490 = vsub.f32 %v1462, %v1485
        %v1491 = vsub.f32 %v1463, %v1487
        %1492 = vst [vmem:[%s278] sm:$0xff] %v1488
        %1493 = vst [vmem:[%s278 + $0x8] sm:$0xff] %v1489
        %1494 = vst [vmem:[%s278 + $0x10] sm:$0xff] %v1490
        %1495 = vst [vmem:[%s278 + $0x18] sm:$0xff] %v1491
        %s1496 = sand.u32 %s141, 1
        %s1497 = scalar_lea.sflag [#allocation4], %s1496
        %s1498 = sand.u32 %s141, 1
        %s1499 = smul.addr %s1498, 32
        %s1500 = scalar_lea.vmem [#allocation8], %s1499
        // Predicated region
        $region53: #{tpu_custom_call.1} parent=39 // pred_check
          %p1501 = pneg %p151
        $region54: #{tpu_custom_call.1} parent=39 // pred_check_branch
          %1503 = sbr.rel (%p1501) target = $region56
        $region55: #{tpu_custom_call.1} parent=39 // pred_region
          %s1504 = smul.u32 4, %s23
          %1506 = vsyncadd %s1497, 0
          %s1507 = smul.addr %s1504, 8
          %s1508 = scalar_lea.hbm %s5, %s1507
          %s1509 = sshll.u32 %s1500, 4
          %s1510 = int_to_ptr.vmem [resolvable:$true] %s1509
          %s1511 = sshll.u32 %s1508, 4
          %s1512 = int_to_ptr.hbm [resolvable:$true] %s1511
          %1517 = dma.vmem_to_hbm [thread:$0]  %s1510, 512, %s1512, %s1497, 128, 128, 8
        $region56: #{tpu_custom_call.1} parent=39 // pred_fallthru
          _
      $region40: #{tpu_custom_call.1} parent=5 // pred_fallthru
        _
      %p1518 = scmp.le.s32.totalorder 2, %s18
      // Predicated region
      $region57: #{tpu_custom_call.1} parent=5 // pred_check
        %p1519 = pneg %p1518
      $region58: #{tpu_custom_call.1} parent=5 // pred_check_branch
        %1521 = sbr.rel (%p1519) target = $region60
      $region59: #{tpu_custom_call.1} parent=5 // pred_region
        %s1522 = ssub.s32 %s18, 2
        // Predicated region
        $region61: #{tpu_custom_call.1} parent=59 // pred_check
          %p1523 = pneg %p157
        $region62: #{tpu_custom_call.1} parent=59 // pred_check_branch
          %1525 = sbr.rel (%p1523) target = $region64
        $region63: #{tpu_custom_call.1} parent=59 // pred_region
          %s1526 = sand.u32 %s142, 1
          %s1527 = scalar_lea.sflag [#allocation4], %s1526
          %s1528 = sand.u32 %s142, 1
          %s1529 = smul.addr %s1528, 32
          %s1530 = scalar_lea.vmem [#allocation8], %s1529
          %1532 = dma.done %s1527, 512
        $region64: #{tpu_custom_call.1} parent=59 // pred_fallthru
          _
      $region60: #{tpu_custom_call.1} parent=5 // pred_fallthru
        _
    $region6: #{tpu_custom_call.1} parent=1 // loop_footer
      %s22 = sadd.s32 1, %s18
    $region7: #{tpu_custom_call.1} parent=1 // loop_footer_branch
      %17 = sbr.rel target = $region3
    $region8: #{tpu_custom_call.1} parent=1 // loop_exit
      _
    %1533 = vsyncpa [#allocation3], 1
    %s1534 = scalar_lea.sflag [#allocation3], 1
    %1535 = vsyncpa %s1534, 1
    %1536 = vsyncpa [#allocation6], 1
    %1537 = vsyncpa [#allocation4], 1
    %s1538 = scalar_lea.sflag [#allocation4], 1
    %1539 = vsyncpa %s1538, 1

</llo_original>
